<compile_context>
chip_gen: v7x
topology: tpu7x:2x2x1
jax: 0.10.0
libtpu: 0.0.40
codegen_flags: <defaults>
</compile_context>

<pallas_src>
import functools

import jax
import jax.numpy as jnp
from jax.experimental import pallas as pl
from jax.experimental.pallas import tpu as pltpu


def _round_up(x, m):
    return (x + m - 1) // m * m


def bert_self_output_kernel(x_ref, res_ref, w_ref, b_ref, g_ref, beta_ref, o_ref,
                            *, eps, matmul_dtype):
    # x_ref, res_ref : (TM, H) token tile (native dtype)
    # w_ref          : (H, H)  dense weight, pre-transposed to (in, out), matmul dtype
    # b_ref, g_ref, beta_ref : (1, H) float32 (pre-cast once in the wrapper)

    x = x_ref[...]
    if matmul_dtype is not None and x.dtype != matmul_dtype:
        # Per-tile cast on the VPU: hides under the MXU/DMA and avoids a
        # separate wrapper-side full (N, H) HBM read+write just to cast.
        x = x.astype(matmul_dtype)

    # Dense: x @ W + b. Operands go to the MXU in matmul_dtype (bf16 native
    # bf16xbf16->f32 path by default); accumulation is f32.
    h = jnp.dot(x, w_ref[...], preferred_element_type=jnp.float32)
    h = h + b_ref[...]

    # Dropout: identity in inference mode.
    # TODO(synk): training-mode dropout would use pltpu.prng_seed / stateful_bernoulli.

    # Residual add + LayerNorm over the hidden axis, computed in f32.
    y = h + res_ref[...].astype(jnp.float32)
    mean = jnp.mean(y, axis=-1, keepdims=True)
    centered = y - mean
    var = jnp.mean(centered * centered, axis=-1, keepdims=True)
    normed = centered * jax.lax.rsqrt(var + eps)
    out = normed * g_ref[...] + beta_ref[...]

    o_ref[...] = out.astype(o_ref.dtype)


def bert_self_output(hidden_states, input_tensor, w_dense, b_dense, ln_gamma, ln_beta,
                     *, eps=1e-12, tile_m=512, matmul_dtype=jnp.bfloat16,
                     out_dtype=None, vmem_limit_bytes=48 * 1024 * 1024):
    """hidden_states, input_tensor: (B, S, H). Returns (B, S, H).

    tile_m: token rows per grid step. 512 amortizes per-step pipeline
      overhead and keeps the 256x256 MXU fed; clamped for tiny inputs. The
      grid axis is 'parallel', so on v7x the two TensorCores split the token
      tiles — for real workloads keep the step count >= 2 (ideally even).
    matmul_dtype: dtype fed to the MXU (default bf16, f32 accumulate). Pass
      None to keep the native dtype (exact-f32 path, 3-6x slower matmul).
    out_dtype: output store dtype (default: hidden_states.dtype). Use bf16
      when the surrounding model is bf16 to halve output store traffic.
    vmem_limit_bytes: 48 MiB — above the real requirement at tm=512 and
      v5e's 16 MiB default scoped limit, below v7x's 64 MiB physical VMEM.
    """
    B, S, H = hidden_states.shape
    N = B * S

    # Clamp the tile to the (8-aligned) token count for tiny inputs. The last
    # (ragged) block is handled by Pallas block clamping: OOB rows are
    # computed on padding and their stores dropped (safe — LN is per-row).
    tm = min(tile_m, _round_up(N, 8))
    grid = (pl.cdiv(N, tm),)

    # (B, S, H) -> (N, H) is a contiguous view (no HBM copy).
    x2 = hidden_states.reshape(N, H)
    r2 = input_tensor.reshape(N, H)

    # PyTorch Linear stores weight as (out, in) and computes x @ W.T;
    # pre-transpose once so the kernel does a plain x @ W on the MXU.
    # (Constant-folded at jit time for constant weights; if weights arrive
    # fresh each call, pre-store them in (in, out) layout upstream instead.)
    w_t = w_dense.T
    if matmul_dtype is not None:
        w_t = w_t.astype(matmul_dtype)

    # Pre-cast the small per-channel params to f32 once (no per-step casts).
    b2 = b_dense.reshape(1, H).astype(jnp.float32)
    g2 = ln_gamma.reshape(1, H).astype(jnp.float32)
    beta2 = ln_beta.reshape(1, H).astype(jnp.float32)

    out_dtype = hidden_states.dtype if out_dtype is None else out_dtype

    # Note: for lane-dense (unmasked) output stores H should be a multiple of
    # 128 (true for real BERT sizes 768/1024); the block spans the full H so
    # odd demo sizes still lower correctly.
    out2 = pl.pallas_call(
        functools.partial(bert_self_output_kernel, eps=eps, matmul_dtype=matmul_dtype),
        out_shape=jax.ShapeDtypeStruct((N, H), out_dtype),
        grid_spec=pltpu.PrefetchScalarGridSpec(
            num_scalar_prefetch=0,
            grid=grid,
            in_specs=[
                pl.BlockSpec((tm, H), lambda i: (i, 0)),   # hidden_states tile
                pl.BlockSpec((tm, H), lambda i: (i, 0)),   # residual tile
                # Resident weight: constant index_map -> fetched once; single
                # buffer frees H*H*dtype bytes of VMEM for bigger token tiles.
                pl.BlockSpec((H, H), lambda i: (0, 0),
                             pipeline_mode=pl.Buffered(buffer_count=1)),
                pl.BlockSpec((1, H), lambda i: (0, 0)),    # dense bias (f32)
                pl.BlockSpec((1, H), lambda i: (0, 0)),    # LN gamma  (f32)
                pl.BlockSpec((1, H), lambda i: (0, 0)),    # LN beta   (f32)
            ],
            out_specs=pl.BlockSpec((tm, H), lambda i: (i, 0)),
        ),
        compiler_params=pltpu.CompilerParams(
            dimension_semantics=("parallel",),
            vmem_limit_bytes=vmem_limit_bytes),
    )(x2, r2, w_t, b2, g2, beta2)

    return out2.reshape(B, S, H)


def _reference(hidden_states, input_tensor, w_dense, b_dense, ln_gamma, ln_beta,
               eps=1e-12, matmul_dtype=None):
    x, w = hidden_states, w_dense
    if matmul_dtype is not None:
        x = x.astype(matmul_dtype)
        w = w.astype(matmul_dtype)
    h = jnp.einsum("bsh,oh->bso", x, w,
                   preferred_element_type=jnp.float32) + b_dense
    y = h + input_tensor
    mean = jnp.mean(y, axis=-1, keepdims=True)
    var = jnp.mean((y - mean) ** 2, axis=-1, keepdims=True)
    return (y - mean) * jax.lax.rsqrt(var + eps) * ln_gamma + ln_beta


if __name__ == "__main__":
    batch, seq, hidden = 2, 8, 32

    key = jax.random.PRNGKey(0)
    k_x, k_res, k_w, k_b, k_g, k_beta = jax.random.split(key, 6)

    hidden_states = jax.random.normal(k_x, (batch, seq, hidden), dtype=jnp.float32)
    input_tensor = jax.random.normal(k_res, (batch, seq, hidden), dtype=jnp.float32)

    # Deterministic parameter init (nn.Linear(H, H), nn.LayerNorm(H)).
    w_dense = jax.random.normal(k_w, (hidden, hidden), dtype=jnp.float32) * 0.02  # (out, in)
    b_dense = jax.random.normal(k_b, (hidden,), dtype=jnp.float32) * 0.02
    ln_gamma = jnp.ones((hidden,), dtype=jnp.float32) + 0.01 * jax.random.normal(k_g, (hidden,))
    ln_beta = 0.01 * jax.random.normal(k_beta, (hidden,), dtype=jnp.float32)

    out = bert_self_output(hidden_states, input_tensor, w_dense, b_dense, ln_gamma, ln_beta)
    out = jax.block_until_ready(out)

    # Reference mirrors the kernel's bf16-operand / f32-accumulate matmul
    # precision (the default matmul_dtype), so a tight tolerance still holds.
    ref = _reference(hidden_states, input_tensor, w_dense, b_dense, ln_gamma, ln_beta,
                     matmul_dtype=jnp.bfloat16)

    assert out.shape == (batch, seq, hidden)
    assert out.dtype == hidden_states.dtype
    assert jnp.allclose(out, ref, atol=2e-3, rtol=2e-3), "mismatch vs reference"

    print("KERNEL_OK")
</pallas_src>

<mosaic_0001>
module attributes {stable_mosaic.version = 11 : i64} {
  func.func @bert_self_output_kernel(%arg0: i32, %arg1: memref<16x32xf32, #tpu.memory_space<vmem>>, %arg2: memref<16x32xf32, #tpu.memory_space<vmem>>, %arg3: memref<32x32xbf16, #tpu.memory_space<vmem>>, %arg4: memref<1x32xf32, #tpu.memory_space<vmem>>, %arg5: memref<1x32xf32, #tpu.memory_space<vmem>>, %arg6: memref<1x32xf32, #tpu.memory_space<vmem>>, %arg7: memref<16x32xf32, #tpu.memory_space<vmem>>) attributes {dimension_semantics = [#tpu.dimension_semantics<parallel>], iteration_bounds = array<i64: 1>, scalar_prefetch = 0 : i64, scratch_operands = 0 : i64, tpu.core_type = #tpu.core_type<tc>, window_params = [{transform_indices = @transform_0, window_bounds = array<i64: 16, 32>}, {transform_indices = @transform_1, window_bounds = array<i64: 16, 32>}, {pipeline_mode = #tpu.pipeline_mode<synchronous>, transform_indices = @transform_2, window_bounds = array<i64: 32, 32>}, {pipeline_mode = #tpu.pipeline_mode<synchronous>, transform_indices = @transform_3, window_bounds = array<i64: 1, 32>}, {pipeline_mode = #tpu.pipeline_mode<synchronous>, transform_indices = @transform_4, window_bounds = array<i64: 1, 32>}, {pipeline_mode = #tpu.pipeline_mode<synchronous>, transform_indices = @transform_5, window_bounds = array<i64: 1, 32>}, {transform_indices = @transform_6, window_bounds = array<i64: 16, 32>}]} {
    %c0 = arith.constant 0 : index
    %c0_0 = arith.constant 0 : index
    %0 = vector.load %arg1[%c0, %c0_0] : memref<16x32xf32, #tpu.memory_space<vmem>>, vector<16x32xf32>
    %1 = arith.truncf %0 : vector<16x32xf32> to vector<16x32xbf16>
    %c0_1 = arith.constant 0 : index
    %c0_2 = arith.constant 0 : index
    %2 = vector.load %arg3[%c0_1, %c0_2] : memref<32x32xbf16, #tpu.memory_space<vmem>>, vector<32x32xbf16>
    %cst = arith.constant dense<0.000000e+00> : vector<16x32xf32>
    %3 = tpu.matmul %1, %2, %cst {dimension_numbers = #tpu.dot_dimension_numbers<[1], [0], [0], [1], [0, 0, 1, 1], [], []>} : vector<16x32xbf16>, vector<32x32xbf16>, vector<16x32xf32> -> vector<16x32xf32>
    %c0_3 = arith.constant 0 : index
    %c0_4 = arith.constant 0 : index
    %4 = vector.load %arg4[%c0_3, %c0_4] : memref<1x32xf32, #tpu.memory_space<vmem>>, vector<1x32xf32>
    %5 = vector.broadcast %4 : vector<1x32xf32> to vector<16x32xf32>
    %6 = arith.addf %3, %5 : vector<16x32xf32>
    %c0_5 = arith.constant 0 : index
    %c0_6 = arith.constant 0 : index
    %7 = vector.load %arg2[%c0_5, %c0_6] : memref<16x32xf32, #tpu.memory_space<vmem>>, vector<16x32xf32>
    %8 = arith.addf %6, %7 : vector<16x32xf32>
    %cst_7 = arith.constant dense<0.000000e+00> : vector<16xf32>
    %9 = vector.multi_reduction <add>, %8, %cst_7 [1] : vector<16x32xf32> to vector<16xf32>
    %10 = vector.shape_cast %9 : vector<16xf32> to vector<16x1xf32>
    %cst_8 = arith.constant 3.200000e+01 : f32
    %11 = vector.broadcast %cst_8 : f32 to vector<16x1xf32>
    %12 = arith.divf %10, %11 : vector<16x1xf32>
    %13 = vector.broadcast %12 : vector<16x1xf32> to vector<16x32xf32>
    %14 = arith.subf %8, %13 : vector<16x32xf32>
    %15 = arith.mulf %14, %14 : vector<16x32xf32>
    %cst_9 = arith.constant dense<0.000000e+00> : vector<16xf32>
    %16 = vector.multi_reduction <add>, %15, %cst_9 [1] : vector<16x32xf32> to vector<16xf32>
    %17 = vector.shape_cast %16 : vector<16xf32> to vector<16x1xf32>
    %cst_10 = arith.constant 3.200000e+01 : f32
    %18 = vector.broadcast %cst_10 : f32 to vector<16x1xf32>
    %19 = arith.divf %17, %18 : vector<16x1xf32>
    %cst_11 = arith.constant 9.99999996E-13 : f32
    %20 = vector.broadcast %cst_11 : f32 to vector<16x1xf32>
    %21 = arith.addf %19, %20 : vector<16x1xf32>
    %22 = math.rsqrt %21 : vector<16x1xf32>
    %23 = vector.broadcast %22 : vector<16x1xf32> to vector<16x32xf32>
    %24 = arith.mulf %14, %23 : vector<16x32xf32>
    %c0_12 = arith.constant 0 : index
    %c0_13 = arith.constant 0 : index
    %25 = vector.load %arg5[%c0_12, %c0_13] : memref<1x32xf32, #tpu.memory_space<vmem>>, vector<1x32xf32>
    %26 = vector.broadcast %25 : vector<1x32xf32> to vector<16x32xf32>
    %27 = arith.mulf %24, %26 : vector<16x32xf32>
    %c0_14 = arith.constant 0 : index
    %c0_15 = arith.constant 0 : index
    %28 = vector.load %arg6[%c0_14, %c0_15] : memref<1x32xf32, #tpu.memory_space<vmem>>, vector<1x32xf32>
    %29 = vector.broadcast %28 : vector<1x32xf32> to vector<16x32xf32>
    %30 = arith.addf %27, %29 : vector<16x32xf32>
    %c0_16 = arith.constant 0 : index
    %c0_17 = arith.constant 0 : index
    %31 = vector.load %arg7[%c0_16, %c0_17] : memref<16x32xf32, #tpu.memory_space<vmem>>, vector<16x32xf32>
    tpu.vector_store %arg7[%c0_16, %c0_17], %30 {strides = array<i32>} : memref<16x32xf32, #tpu.memory_space<vmem>>, vector<16x32xf32>,
    return
  }
  func.func @transform_0(%arg0: i32) -> (i32, i32) {
    %c0_i32 = arith.constant 0 : i32
    %c0_i32_0 = arith.constant 0 : i32
    return %arg0, %c0_i32 : i32, i32
  }
  func.func @transform_1(%arg0: i32) -> (i32, i32) {
    %c0_i32 = arith.constant 0 : i32
    %c0_i32_0 = arith.constant 0 : i32
    return %arg0, %c0_i32 : i32, i32
  }
  func.func @transform_2(%arg0: i32) -> (i32, i32) {
    %c0_i32 = arith.constant 0 : i32
    %c0_i32_0 = arith.constant 0 : i32
    %c0_i32_1 = arith.constant 0 : i32
    return %c0_i32, %c0_i32_0 : i32, i32
  }
  func.func @transform_3(%arg0: i32) -> (i32, i32) {
    %c0_i32 = arith.constant 0 : i32
    %c0_i32_0 = arith.constant 0 : i32
    %c0_i32_1 = arith.constant 0 : i32
    return %c0_i32, %c0_i32_0 : i32, i32
  }
  func.func @transform_4(%arg0: i32) -> (i32, i32) {
    %c0_i32 = arith.constant 0 : i32
    %c0_i32_0 = arith.constant 0 : i32
    %c0_i32_1 = arith.constant 0 : i32
    return %c0_i32, %c0_i32_0 : i32, i32
  }
  func.func @transform_5(%arg0: i32) -> (i32, i32) {
    %c0_i32 = arith.constant 0 : i32
    %c0_i32_0 = arith.constant 0 : i32
    %c0_i32_1 = arith.constant 0 : i32
    return %c0_i32, %c0_i32_0 : i32, i32
  }
  func.func @transform_6(%arg0: i32) -> (i32, i32) {
    %c0_i32 = arith.constant 0 : i32
    %c0_i32_0 = arith.constant 0 : i32
    return %arg0, %c0_i32 : i32, i32
  }
}

</mosaic_0001>

<llo_original>
// kernel: tpu_custom_call.1
$region0: #{tpu_custom_call.1}
  #allocation0 [shape = 'u32[]', space=smem, size = 0x4, offset = 0x4, fixed_abs, tag = 'smem constant byte address 0x4 - core index']
  #allocation1 [shape = 'u32[144,128]{1,0:T(1,128)}', space=vmem, size = 0x12000, scoped, tag = 'internal scratch']
  %s0 = inlined_call_operand.hbm [shape: f32[16,32], index: 0, kind: input, shape index: {}]
  %s1 = inlined_call_operand.hbm [shape: f32[16,32], index: 1, kind: input, shape index: {}]
  %s2 = inlined_call_operand.hbm [shape: bf16[32,32], index: 2, kind: input, shape index: {}]
  %s3 = inlined_call_operand.vmem [shape: f32[1,32], index: 3, kind: input, shape index: {}]
  %s4 = inlined_call_operand.vmem [shape: f32[1,32], index: 4, kind: input, shape index: {}]
  %s5 = inlined_call_operand.vmem [shape: f32[1,32], index: 5, kind: input, shape index: {}]
  %s6 = inlined_call_operand.hbm [shape: f32[16,32], index: 6, kind: output, shape index: {}]
  %s7 = sld [smem:[#allocation0]]
  $region46: #{tpu_custom_call.1} parent=0
    _
  %s9 = ssub.s32 1, %s7
  %s10 = scalar_select 0, %s9, %s7
  $region1: #{tpu_custom_call.1} parent=0
    #allocation2 [shape = 'u8[8192]{0}', space=vmem, size = 0x2000, scoped, tag = 'input window, operand 0, single buffered']
    #allocation3 [shape = 's32[1]{0}', space=sflag, size = 0x4, scoped, tag = 'scoped memory for tpu_custom_call.1']
    #allocation4 [shape = 's32[1]{0}', space=sflag, size = 0x4, scoped, tag = 'scoped memory for tpu_custom_call.1']
    #allocation5 [shape = 'u8[8192]{0}', space=vmem, size = 0x2000, scoped, tag = 'input window, operand 1, single buffered']
    #allocation6 [shape = 's32[1]{0}', space=sflag, size = 0x4, scoped, tag = 'scoped memory for tpu_custom_call.1']
    #allocation7 [shape = 'u8[8192]{0}', space=vmem, size = 0x2000, scoped, tag = 'input window, operand 2, single buffered']
    #allocation8 [shape = 'u8[8192]{0}', space=vmem, size = 0x2000, scoped, tag = 'output window, operand 0, single buffered']
    %11 = vsyncpa [#allocation3], 0
    %12 = vsyncpa [#allocation6], 0
    %13 = vsyncpa [#allocation4], 0
    // Predicated region
    $region2: #{tpu_custom_call.1} parent=1 // pred_check
      _
    $region3: #{tpu_custom_call.1} parent=1 // pred_check_branch
      %15 = sbr.rel (0) target = $region5
    $region4: #{tpu_custom_call.1} parent=1 // pred_region
      %s17 = ssub.s32 256, 256
      %18 = vsyncadd [#allocation3], %s17
      %s19 = sshll.u32 [#allocation2], 4
      %s20 = int_to_ptr.vmem [resolvable:$true] %s19
      %25 = dma.hbm_to_vmem [thread:$0]  %s0, 256, %s20, [#allocation3], 128, 128, 8
    $region5: #{tpu_custom_call.1} parent=1 // pred_fallthru
      _
    // Predicated region
    $region6: #{tpu_custom_call.1} parent=1 // pred_check
      _
    $region7: #{tpu_custom_call.1} parent=1 // pred_check_branch
      %27 = sbr.rel (0) target = $region9
    $region8: #{tpu_custom_call.1} parent=1 // pred_region
      %s29 = ssub.s32 256, 256
      %30 = vsyncadd [#allocation6], %s29
      %s31 = sshll.u32 [#allocation5], 4
      %s32 = int_to_ptr.vmem [resolvable:$true] %s31
      %37 = dma.hbm_to_vmem [thread:$0]  %s1, 256, %s32, [#allocation6], 128, 128, 8
    $region9: #{tpu_custom_call.1} parent=1 // pred_fallthru
      _
    // Predicated region
    $region10: #{tpu_custom_call.1} parent=1 // pred_check
      _
    $region11: #{tpu_custom_call.1} parent=1 // pred_check_branch
      %39 = sbr.rel (0) target = $region13
    $region12: #{tpu_custom_call.1} parent=1 // pred_region
      %s41 = ssub.s32 256, 256
      %42 = vsyncadd [#allocation6], %s41
      %s43 = sshll.u32 [#allocation7], 4
      %s44 = int_to_ptr.vmem [resolvable:$true] %s43
      %49 = dma.hbm_to_vmem [thread:$0]  %s2, 256, %s44, [#allocation6], 64, 64, 4
    $region13: #{tpu_custom_call.1} parent=1 // pred_fallthru
      _
    // Predicated region
    $region14: #{tpu_custom_call.1} parent=1 // pred_check
      _
    $region15: #{tpu_custom_call.1} parent=1 // pred_check_branch
      %51 = sbr.rel (0) target = $region17
    $region16: #{tpu_custom_call.1} parent=1 // pred_region
      _
    $region17: #{tpu_custom_call.1} parent=1 // pred_fallthru
      _
    // Predicated region
    $region18: #{tpu_custom_call.1} parent=1 // pred_check
      _
    $region19: #{tpu_custom_call.1} parent=1 // pred_check_branch
      %53 = sbr.rel (0) target = $region21
    $region20: #{tpu_custom_call.1} parent=1 // pred_region
      _
    $region21: #{tpu_custom_call.1} parent=1 // pred_fallthru
      _
    // Predicated region
    $region22: #{tpu_custom_call.1} parent=1 // pred_check
      _
    $region23: #{tpu_custom_call.1} parent=1 // pred_check_branch
      %55 = sbr.rel (0) target = $region25
    $region24: #{tpu_custom_call.1} parent=1 // pred_region
      _
    $region25: #{tpu_custom_call.1} parent=1 // pred_fallthru
      _
    // Predicated region
    $region26: #{tpu_custom_call.1} parent=1 // pred_check
      _
    $region27: #{tpu_custom_call.1} parent=1 // pred_check_branch
      %57 = sbr.rel (0) target = $region29
    $region28: #{tpu_custom_call.1} parent=1 // pred_region
      %58 = dma.done [#allocation3], 256
    $region29: #{tpu_custom_call.1} parent=1 // pred_fallthru
      _
    // Predicated region
    $region30: #{tpu_custom_call.1} parent=1 // pred_check
      _
    $region31: #{tpu_custom_call.1} parent=1 // pred_check_branch
      %60 = sbr.rel (0) target = $region33
    $region32: #{tpu_custom_call.1} parent=1 // pred_region
      %61 = dma.done [#allocation6], 256
    $region33: #{tpu_custom_call.1} parent=1 // pred_fallthru
      _
    // Predicated region
    $region34: #{tpu_custom_call.1} parent=1 // pred_check
      _
    $region35: #{tpu_custom_call.1} parent=1 // pred_check_branch
      %63 = sbr.rel (0) target = $region37
    $region36: #{tpu_custom_call.1} parent=1 // pred_region
      %64 = dma.done [#allocation6], 256
    $region37: #{tpu_custom_call.1} parent=1 // pred_fallthru
      _
    %v66 = vld [vmem:[#allocation2] sm:$0xff]
    %v67 = vld [vmem:[#allocation2 + $0x8] sm:$0xff]
    %v68 = vpack.c.bf16 %v67, %v66
    %v69 = vld [vmem:[#allocation7] sm:$0xf]
    %v70 = vld [vmem:[#allocation7 + $0x4] sm:$0xf]
    %v71 = vld [vmem:[#allocation7 + $0x8] sm:$0xf]
    %v72 = vld [vmem:[#allocation7 + $0xc] sm:$0xf]
    %v73 = vld [vmem:[%s3] sm:$0x1]
    %v75 = vlaneseq
    %v76 = vshrl.u32 %v75, 7
    %v77 = vsub.s32 0, %v76
    %v78 = vrot.slane %v73, %v77
    %v84 = vunpack.c.l.b16 %v69
    %v85 = vunpack.c.l.b16 %v70
    %v86 = vunpack.c.l.b16 %v71
    %v87 = vunpack.c.l.b16 %v72
    %v88 = vpack.c.b16 %v85, %v84
    %v89 = vpack.c.b16 %v87, %v86
    %vm92 = vcmask 261120
    %v94 = vsel %vm92, %v68, 0
    %96 = vmatprep.subr.bf16.mxu0 0
    %97 = vmatpush1.bf16.msra.mxu0 %v88
    %98 = vmatprep.subr.bf16.mxu0 0
    %99 = vmatpush1.bf16.msra.mxu0 %v89
    %100 = vmatprep.subr.bf16.mxu0 0
    %101 = vmatpush1.bf16.msra.mxu0 0
    %102 = vmatprep.subr.bf16.mxu0 0
    %103 = vmatpush1.bf16.msra.mxu0 0
    %104 = vmatprep.subr.bf16.mxu0 0
    %105 = vmatpush1.bf16.msra.mxu0 0
    %106 = vmatprep.subr.bf16.mxu0 0
    %107 = vmatpush1.bf16.msra.mxu0 0
    %108 = vmatprep.subr.bf16.mxu0 0
    %109 = vmatpush1.bf16.msra.mxu0 0
    %110 = vmatprep.subr.bf16.mxu0 0
    %111 = vmatpush1.bf16.msra.mxu0 0
    %112 = vmatprep.subr.bf16.mxu0 0
    %113 = vmatpush1.bf16.msra.mxu0 0
    %114 = vmatprep.subr.bf16.mxu0 0
    %115 = vmatpush1.bf16.msra.mxu0 0
    %116 = vmatprep.subr.bf16.mxu0 0
    %117 = vmatpush1.bf16.msra.mxu0 0
    %118 = vmatprep.subr.bf16.mxu0 0
    %119 = vmatpush1.bf16.msra.mxu0 0
    %120 = vmatprep.subr.bf16.mxu0 0
    %121 = vmatpush1.bf16.msra.mxu0 0
    %122 = vmatprep.subr.bf16.mxu0 0
    %123 = vmatpush1.bf16.msra.mxu0 0
    %124 = vmatprep.subr.bf16.mxu0 0
    %125 = vmatpush1.bf16.msra.mxu0 0
    %126 = vmatprep.subr.bf16.mxu0 0
    %127 = vmatpush1.bf16.msra.mxu0 0
    %128 = vmatprep.mubr.bf16.mxu0 0
    %129 = vmatmul.mubr.bf16.gmra.mrb[0].mxu0 %v94
    %v130 = vpop.f32.mrb[0].mxu0
    %v131 = vadd.f32 %v78, %v130
    %v132 = vpop.f32.mrb[0].mxu0
    %v133 = vpop.f32.mrb[0].mxu0
    %v134 = vadd.f32 %v78, %v133
    %v135 = vpop.f32.mrb[0].mxu0
    %136 = vdwg.mxu0
    %v137 = vld [vmem:[#allocation5] sm:$0xff]
    %v138 = vld [vmem:[#allocation5 + $0x8] sm:$0xff]
    %v139 = vadd.f32 %v131, %v137
    %v140 = vadd.f32 %v134, %v138
    %v141 = vsel %vm92, %v139, 0.0
    %142 = vadd.xlane.f32.xlu0 %v141
    %v143 = vpop.xlane.xlu0 %142
    %v144 = vsel %vm92, %v140, 0.0
    %145 = vadd.xlane.f32.xlu0 %v144
    %v146 = vpop.xlane.xlu0 %145
    %v147 = vrcp.pop 32.0
    %v148 = vmul.f32 %v143, %v147
    %v149 = vmul.f32 %v146, %v147
    %v150 = vsub.f32 %v139, %v148
    %v151 = vsub.f32 %v140, %v149
    %v152 = vmul.f32 %v150, %v150
    %v153 = vmul.f32 %v151, %v151
    %v154 = vsel %vm92, %v152, 0.0
    %155 = vadd.xlane.f32.xlu0 %v154
    %v156 = vpop.xlane.xlu0 %155
    %v157 = vsel %vm92, %v153, 0.0
    %158 = vadd.xlane.f32.xlu0 %v157
    %v159 = vpop.xlane.xlu0 %158
    %v160 = vmul.f32 %v156, %v147
    %v161 = vmul.f32 %v159, %v147
    %v162 = vadd.f32 %v160, 1e-12
    %v163 = vadd.f32 %v161, 1e-12
    %v164 = vrsqrt.pop %v162
    %v165 = vrsqrt.pop %v163
    %v166 = vmul.f32 %v150, %v164
    %v167 = vmul.f32 %v151, %v165
    %v168 = vld [vmem:[%s4] sm:$0x1]
    %v170 = vlaneseq
    %v171 = vshrl.u32 %v170, 7
    %v172 = vsub.s32 0, %v171
    %v173 = vrot.slane %v168, %v172
    %v175 = vmul.f32 %v166, %v173
    %v176 = vmul.f32 %v167, %v173
    %v177 = vld [vmem:[%s5] sm:$0x1]
    %v179 = vlaneseq
    %v180 = vshrl.u32 %v179, 7
    %v181 = vsub.s32 0, %v180
    %v182 = vrot.slane %v177, %v181
    %v184 = vadd.f32 %v175, %v182
    %v185 = vadd.f32 %v176, %v182
    %186 = vst.msk [vmem:[#allocation8] sm:$0xff] %vm92, %v184
    %187 = vst.msk [vmem:[#allocation8 + $0x8] sm:$0xff] %vm92, %v185
    // Predicated region
    $region38: #{tpu_custom_call.1} parent=1 // pred_check
      _
    $region39: #{tpu_custom_call.1} parent=1 // pred_check_branch
      %189 = sbr.rel (0) target = $region41
    $region40: #{tpu_custom_call.1} parent=1 // pred_region
      %s191 = ssub.s32 256, 256
      %192 = vsyncadd [#allocation4], %s191
      %s193 = sshll.u32 [#allocation8], 4
      %s194 = int_to_ptr.vmem [resolvable:$true] %s193
      %199 = dma.vmem_to_hbm [thread:$0]  %s194, 256, %s6, [#allocation4], 128, 128, 8
    $region41: #{tpu_custom_call.1} parent=1 // pred_fallthru
      _
    // Predicated region
    $region42: #{tpu_custom_call.1} parent=1 // pred_check
      _
    $region43: #{tpu_custom_call.1} parent=1 // pred_check_branch
      %201 = sbr.rel (0) target = $region45
    $region44: #{tpu_custom_call.1} parent=1 // pred_region
      %202 = dma.done [#allocation4], 256
    $region45: #{tpu_custom_call.1} parent=1 // pred_fallthru
      _
    %203 = vsyncpa [#allocation3], 1
    %204 = vsyncpa [#allocation6], 1
    %205 = vsyncpa [#allocation4], 1

</llo_original>
